<compile_context>
chip_gen: v7x
topology: tpu7x:2x2x1
jax: 0.10.0
libtpu: 0.0.40
codegen_flags: <defaults>
</compile_context>

<pallas_src>
import math

import jax
import jax.numpy as jnp
from jax.experimental import pallas as pl
from jax.experimental.pallas import tpu as pltpu


_MAX_DMA_SLOTS = 4            # concurrent HBM->HBM DMAs kept in flight
_MIN_CHUNK_BYTES = 512 * 1024 # don't split tiny copies into multiple DMAs
_MAX_LANE_WIDTH = 32768       # cap on the flattened lane dimension


def _lane_dense_2d_shape(shape, itemsize):
    """Factor the flattened array into (rows, cols) with cols % 128 == 0 when
    possible, keeping enough rows to split into _MAX_DMA_SLOTS chunks for
    large arrays.  Falls back to (N*C, H*W) when the total element count is
    not a multiple of 128 (lane width is irrelevant for HBM->HBM DMA)."""
    total = math.prod(shape)
    total_bytes = total * itemsize
    want_rows = int(min(_MAX_DMA_SLOTS, max(1, total_bytes // _MIN_CHUNK_BYTES)))
    if total % 128 == 0:
        max_cols = min(total // want_rows, _MAX_LANE_WIDTH, total)
        max_cols = max(128, max_cols - max_cols % 128)
        for cols in range(max_cols, 127, -128):
            if total % cols == 0:
                return total // cols, cols
    n, c, h, w = shape
    return n * c, h * w


def _row_chunks(rows, cols, itemsize):
    """Static contiguous row chunks (start, size) covering [0, rows)."""
    total_bytes = rows * cols * itemsize
    slots = int(min(_MAX_DMA_SLOTS, rows, max(1, total_bytes // _MIN_CHUNK_BYTES)))
    base, rem = divmod(rows, slots)
    chunks, start = [], 0
    for s in range(slots):
        size = base + (1 if s < rem else 0)
        chunks.append((start, size))
        start += size
    return chunks


def _make_hbm_copy_kernel(chunks):
    """Identity copy: direct HBM->HBM DMAs, one per chunk, all in flight."""
    def kernel(x_hbm, o_hbm, sems):
        copies = []
        for slot, (start, size) in enumerate(chunks):
            cp = pltpu.make_async_copy(
                x_hbm.at[pl.ds(start, size), :],
                o_hbm.at[pl.ds(start, size), :],
                sems.at[slot],
            )
            cp.start()
            copies.append(cp)
        for cp in copies:
            cp.wait()
    return kernel


def _dfa_identity_copy(x2d: jax.Array) -> jax.Array:
    rows, cols = x2d.shape
    itemsize = jnp.dtype(x2d.dtype).itemsize
    chunks = _row_chunks(rows, cols, itemsize)

    return pl.pallas_call(
        _make_hbm_copy_kernel(chunks),
        out_shape=jax.ShapeDtypeStruct((rows, cols), x2d.dtype),
        in_specs=[pl.BlockSpec(memory_space=pl.ANY)],   # raw HBM ref, no auto-DMA
        out_specs=pl.BlockSpec(memory_space=pl.ANY),    # written only via DMA
        scratch_shapes=[pltpu.SemaphoreType.DMA((len(chunks),))],
        compiler_params=pltpu.CompilerParams(has_side_effects=True),
        cost_estimate=pl.CostEstimate(
            flops=0,
            transcendentals=0,
            bytes_accessed=2 * rows * cols * itemsize,
        ),
    )(x2d)


def dfa_layer_forward(x: jax.Array,
                      materialize: bool = False,
                      donate: bool = False) -> jax.Array:
    """Forward pass of DFALayer: returns the input unchanged.

    materialize=False (default): zero-cost, no kernel launch — `return x`.
    materialize=True, donate=True: a donated identity needs no kernel — `return x`.
    materialize=True, donate=False: distinct output buffer produced by the
    direct HBM->HBM DMA identity-copy kernel.
    """
    # TODO(synk): backward hook registration (DFA feedback path) is
    # backward-only and has no forward-pass Pallas equivalent.
    n, c, h, w = x.shape
    size = c  # mirrors `self.size = input.shape[1]` (pure Python bookkeeping)
    del size

    if not materialize or donate:
        return x

    rows, cols = _lane_dense_2d_shape(x.shape, jnp.dtype(x.dtype).itemsize)
    y2d = _dfa_identity_copy(x.reshape(rows, cols))
    return y2d.reshape(x.shape)


if __name__ == "__main__":
    key = jax.random.PRNGKey(0)
    # Small NCHW input consistent with a conv-style DFA layer.
    x = jax.random.normal(key, (2, 4, 16, 16), dtype=jnp.float32)

    # Zero-cost production path: no kernel launch at all.
    y_fast = dfa_layer_forward(x)
    assert y_fast is x

    # Donated identity also short-circuits (no kernel launch).
    y_don = dfa_layer_forward(x, materialize=True, donate=True)
    assert y_don is x

    # Materialized path exercising the HBM->HBM DMA identity-copy kernel.
    y = dfa_layer_forward(x, materialize=True)
    y = jax.block_until_ready(y)
    assert y.shape == x.shape
    assert y.dtype == x.dtype
    assert bool(jnp.all(y == x))

    # Packed-dtype path (bf16).
    x_bf16 = jax.random.normal(jax.random.PRNGKey(1), (2, 8, 16, 16)).astype(jnp.bfloat16)
    y_bf16 = jax.block_until_ready(dfa_layer_forward(x_bf16, materialize=True))
    assert bool(jnp.all(y_bf16 == x_bf16))

    # Non-128-multiple spatial width (total elements still handled generically).
    x_odd = jax.random.normal(jax.random.PRNGKey(2), (2, 8, 16, 17), dtype=jnp.float32)
    y_odd = jax.block_until_ready(dfa_layer_forward(x_odd, materialize=True))
    assert bool(jnp.all(y_odd == x_odd))

    print("KERNEL_OK")
</pallas_src>

<mosaic_0001>
module attributes {stable_mosaic.version = 11 : i64} {
  func.func @kernel(%arg0: memref<1x2048xf32, #tpu.memory_space<any>>, %arg1: memref<1x2048xf32, #tpu.memory_space<any>>, %arg2: memref<1x!tpu.dma_semaphore, #tpu.memory_space<semaphore_mem>>) attributes {dimension_semantics = [], scalar_prefetch = 0 : i64, scratch_operands = 1 : i64, tpu.core_type = #tpu.core_type<tc>} {
    %c0_i32 = arith.constant 0 : i32
    %c0_i32_0 = arith.constant 0 : i32
    %c0_i32_1 = arith.constant 0 : i32
    %0 = tpu.memref_slice %arg0[%c0_i32_0, %c0_i32_1] : memref<1x2048xf32, #tpu.memory_space<any>> -> memref<1x2048xf32, #tpu.memory_space<any>>
    %c0_i32_2 = arith.constant 0 : i32
    %c0_i32_3 = arith.constant 0 : i32
    %1 = tpu.memref_slice %arg1[%c0_i32_2, %c0_i32_3] : memref<1x2048xf32, #tpu.memory_space<any>> -> memref<1x2048xf32, #tpu.memory_space<any>>
    %2 = tpu.memref_slice %arg2[%c0_i32] : memref<1x!tpu.dma_semaphore, #tpu.memory_space<semaphore_mem>> -> memref<1x!tpu.dma_semaphore, #tpu.memory_space<semaphore_mem>>
    %3 = tpu.memref_squeeze %2 : memref<1x!tpu.dma_semaphore, #tpu.memory_space<semaphore_mem>> -> memref<!tpu.dma_semaphore, #tpu.memory_space<semaphore_mem>>
    tpu.enqueue_dma source(%0 : memref<1x2048xf32, #tpu.memory_space<any>>) target(%1 : memref<1x2048xf32, #tpu.memory_space<any>>) target_semaphore(%3 : memref<!tpu.dma_semaphore, #tpu.memory_space<semaphore_mem>>)
    %c0_i32_4 = arith.constant 0 : i32
    %c0_i32_5 = arith.constant 0 : i32
    %c0_i32_6 = arith.constant 0 : i32
    %4 = tpu.memref_slice %arg0[%c0_i32_5, %c0_i32_6] : memref<1x2048xf32, #tpu.memory_space<any>> -> memref<1x2048xf32, #tpu.memory_space<any>>
    %c0_i32_7 = arith.constant 0 : i32
    %c0_i32_8 = arith.constant 0 : i32
    %5 = tpu.memref_slice %arg1[%c0_i32_7, %c0_i32_8] : memref<1x2048xf32, #tpu.memory_space<any>> -> memref<1x2048xf32, #tpu.memory_space<any>>
    %6 = tpu.memref_slice %arg2[%c0_i32_4] : memref<1x!tpu.dma_semaphore, #tpu.memory_space<semaphore_mem>> -> memref<1x!tpu.dma_semaphore, #tpu.memory_space<semaphore_mem>>
    %7 = tpu.memref_squeeze %6 : memref<1x!tpu.dma_semaphore, #tpu.memory_space<semaphore_mem>> -> memref<!tpu.dma_semaphore, #tpu.memory_space<semaphore_mem>>
    tpu.wait_dma2 semaphore(%7 : memref<!tpu.dma_semaphore, #tpu.memory_space<semaphore_mem>>) src(%4 : memref<1x2048xf32, #tpu.memory_space<any>>) dst(%5 : memref<1x2048xf32, #tpu.memory_space<any>>)
    return
  }
}

</mosaic_0001>

<llo_original>
// kernel: tpu_custom_call.1
$region0: #{tpu_custom_call.1}
  #allocation0 [shape = 'u32[]', space=smem, size = 0x4, offset = 0x4, fixed_abs, tag = 'smem constant byte address 0x4 - core index']
  #allocation1 [shape = 'u32[144,128]{1,0:T(1,128)}', space=vmem, size = 0x12000, scoped, tag = 'internal scratch']
  #allocation2 [shape = 's32[1]{0}', space=sflag, size = 0x4, scoped, tag = 'scratch operand']
  #allocation3 [shape = 's32[]', space=sflag, size = 0x4, offset = 0, fixed_abs, tag = 'sflag constant byte address 0x0 - dummy sync flag']
  #allocation4 [shape = 'u32[0]{0}', space=smem, size = 0, offset = 0, fixed_abs, tag = 'smem constant byte address 0x0 - null']
  %s0 = inlined_call_operand.hbm [shape: f32[1,2048], index: 0, kind: input, shape index: {}]
  %s1 = inlined_call_operand.hbm [shape: f32[1,2048], index: 1, kind: output, shape index: {}]
  %s2 = sld [smem:[#allocation0]]
  $region2: #{tpu_custom_call.1} parent=0
    _
  %s4 = ssub.s32 1, %s2
  %s5 = scalar_select 0, %s4, %s2
  %s7 = sshll.u32 1, 14
  %s8 = sxor.u32 4294967295, %s7
  %s11 = sshll.u32 3, 24
  %s12 = sxor.u32 4294967295, %s11
  %s13 = sand.u32 0, %s12
  %s15 = sor.u32 %s13, 0
  %18 = dma.general %s0, 256, %s1, [#allocation2], [#allocation3], [#allocation4], %s15, 0
  %s19 = smul.u32 1, 16
  %s20 = sshll.u32 %s19, 4
  %21 = dma.done [#allocation2], %s20
  %22 = vsyncmov [#allocation2]
  %s23 = vpop.sfrf %22
  %p24 = scmp.eq.s32.totalorder %s23, 0
  %p25 = pneg %p24
  %27 = shalt.err (%p25)

</llo_original>
